<compile_context>
chip_gen: v5e
topology: v5e:2x2
jax: 0.10.0
libtpu: 0.0.40
codegen_flags: <defaults>
</compile_context>

<pallas_src>
import jax
import jax.numpy as jnp
from jax.experimental import pallas as pl
from jax.experimental.pallas import tpu as pltpu


def _cat_kernel(x1_ref, x2_ref, out_ref):
    # 2-D views: (C1, L), (C2, L) -> (C1+C2+min(10,C1+C2), L)
    # Assemble the entire result in vregs and do a single full-block store
    # (avoids read-modify-write masked vst at unaligned sublane offsets).
    x1 = x1_ref[...]
    x2 = x2_ref[...]
    v3 = jnp.concatenate([x1, x2], axis=0)          # torch.cat([x1, x2], dim=1)
    keep = min(10, v3.shape[0])                     # v2 = v3[:, 0:10] (static slice)
    v2 = v3[:keep]
    out_ref[...] = jnp.concatenate([v3, v2], axis=0)  # torch.cat([v3, v2], dim=1)


def model_forward(x1, x2):
    B, C1, L = x1.shape
    B2, C2, L2 = x2.shape
    assert B == B2 == 1 and L == L2, "kernel specialized for the module's B=1 layout"
    keep = min(10, C1 + C2)
    out_c = C1 + C2 + keep

    # Squeeze the degenerate batch dim in the wrapper (free reshape) so the
    # kernel sees plain (C, L) tiles; no grid, whole arrays resident in VMEM.
    out2d = pl.pallas_call(
        _cat_kernel,
        out_shape=jax.ShapeDtypeStruct((out_c, L), x1.dtype),
        in_specs=[
            pl.BlockSpec(memory_space=pltpu.MemorySpace.VMEM),
            pl.BlockSpec(memory_space=pltpu.MemorySpace.VMEM),
        ],
        out_specs=pl.BlockSpec(memory_space=pltpu.MemorySpace.VMEM),
    )(x1.reshape(C1, L), x2.reshape(C2, L))

    return out2d.reshape(B, out_c, L)


def model_forward_ref(x1, x2):
    v3 = jnp.concatenate([x1, x2], axis=1)
    v2 = v3[:, 0:10]
    return jnp.concatenate([v3, v2], axis=1)


if __name__ == "__main__":
    key = jax.random.PRNGKey(0)
    k1, k2 = jax.random.split(key)
    # Shapes from the module: x1 = (1, 1, 60), x2 = (1, 9, 60)
    x1 = jax.random.normal(k1, (1, 1, 60), dtype=jnp.float32)
    x2 = jax.random.normal(k2, (1, 9, 60), dtype=jnp.float32)

    out = model_forward(x1, x2)
    out = jax.block_until_ready(out)

    ref = model_forward_ref(x1, x2)
    assert out.shape == (1, 20, 60), out.shape
    assert jnp.allclose(out, ref), "mismatch vs reference"
    print("KERNEL_OK")
</pallas_src>

<mosaic_0001>
module attributes {stable_mosaic.version = 11 : i64} {
  func.func @_cat_kernel(%arg0: memref<1x60xf32, #tpu.memory_space<vmem>>, %arg1: memref<9x60xf32, #tpu.memory_space<vmem>>, %arg2: memref<20x60xf32, #tpu.memory_space<vmem>>) attributes {dimension_semantics = [], scalar_prefetch = 0 : i64, scratch_operands = 0 : i64, tpu.core_type = #tpu.core_type<tc>} {
    %c0 = arith.constant 0 : index
    %c0_0 = arith.constant 0 : index
    %0 = vector.load %arg0[%c0, %c0_0] : memref<1x60xf32, #tpu.memory_space<vmem>>, vector<1x60xf32>
    %c0_1 = arith.constant 0 : index
    %c0_2 = arith.constant 0 : index
    %1 = vector.load %arg1[%c0_1, %c0_2] : memref<9x60xf32, #tpu.memory_space<vmem>>, vector<9x60xf32>
    %2 = tpu.concatenate %0, %1 in 0 : vector<1x60xf32>, vector<9x60xf32> -> vector<10x60xf32>
    %3 = tpu.concatenate %2, %2 in 0 : vector<10x60xf32>, vector<10x60xf32> -> vector<20x60xf32>
    %c0_3 = arith.constant 0 : index
    %c0_4 = arith.constant 0 : index
    %4 = vector.load %arg2[%c0_3, %c0_4] : memref<20x60xf32, #tpu.memory_space<vmem>>, vector<20x60xf32>
    tpu.vector_store %arg2[%c0_3, %c0_4], %3 {strides = array<i32>} : memref<20x60xf32, #tpu.memory_space<vmem>>, vector<20x60xf32>,
    return
  }
}

</mosaic_0001>

<llo_original>
// kernel: tpu_custom_call.1
$region0: #{tpu_custom_call.1}
  #allocation0 [shape = 'u32[]', space=smem, size = 0x4, offset = 0x4, fixed_abs, tag = 'smem constant byte address 0x4 - core index']
  #allocation1 [shape = 'u32[72,128]{1,0:T(1,128)}', space=vmem, size = 0x9000, scoped, tag = 'internal scratch']
  %s0 = inlined_call_operand.hbm [shape: f32[1,60], index: 0, kind: input, shape index: {}]
  %s1 = inlined_call_operand.hbm [shape: f32[9,60], index: 1, kind: input, shape index: {}]
  %s2 = inlined_call_operand.hbm [shape: f32[20,60], index: 2, kind: output, shape index: {}]
  %s3 = sld [smem:[#allocation0]]
  $region26: #{tpu_custom_call.1} parent=0
    _
  %s5 = ssub.s32 1, %s3
  %s6 = scalar_select 0, %s5, %s3
  $region1: #{tpu_custom_call.1} parent=0
    #allocation2 [shape = 'u8[512]{0}', space=vmem, size = 0x400, scoped, tag = 'input window, operand 0, single buffered']
    #allocation3 [shape = 's32[1]{0}', space=sflag, size = 0x4, scoped, tag = 'scoped memory for tpu_custom_call.1']
    #allocation4 [shape = 's32[1]{0}', space=sflag, size = 0x4, scoped, tag = 'scoped memory for tpu_custom_call.1']
    #allocation5 [shape = 'u8[8192]{0}', space=vmem, size = 0x2000, scoped, tag = 'input window, operand 1, single buffered']
    #allocation6 [shape = 's32[1]{0}', space=sflag, size = 0x4, scoped, tag = 'scoped memory for tpu_custom_call.1']
    #allocation7 [shape = 'u8[12288]{0}', space=vmem, size = 0x3000, scoped, tag = 'output window, operand 0, single buffered']
    %7 = vsyncpa [#allocation3], 0
    %8 = vsyncpa [#allocation6], 0
    %9 = vsyncpa [#allocation4], 0
    // Predicated region
    $region2: #{tpu_custom_call.1} parent=1 // pred_check
      _
    $region3: #{tpu_custom_call.1} parent=1 // pred_check_branch
      %11 = sbr.rel (0) target = $region5
    $region4: #{tpu_custom_call.1} parent=1 // pred_region
      %13 = vsyncadd [#allocation3], 0
      %s15 = sshll.u32 %s0, 4
      %s16 = int_to_ptr.hbm [resolvable:$true] %s15
      %s17 = sshll.u32 [#allocation2], 4
      %s18 = int_to_ptr.vmem [resolvable:$true] %s17
      %20 = dma.hbm_to_vmem [thread:$0]  %s16, 16, %s18, [#allocation3]
    $region5: #{tpu_custom_call.1} parent=1 // pred_fallthru
      _
    // Predicated region
    $region6: #{tpu_custom_call.1} parent=1 // pred_check
      _
    $region7: #{tpu_custom_call.1} parent=1 // pred_check_branch
      %22 = sbr.rel (0) target = $region9
    $region8: #{tpu_custom_call.1} parent=1 // pred_region
      %24 = vsyncadd [#allocation6], 0
      %s25 = sshll.u32 %s1, 4
      %s26 = int_to_ptr.hbm [resolvable:$true] %s25
      %s27 = sshll.u32 [#allocation5], 4
      %s28 = int_to_ptr.vmem [resolvable:$true] %s27
      %33 = dma.hbm_to_vmem [thread:$0]  %s26, 256, %s28, [#allocation6], 128, 128, 8
    $region9: #{tpu_custom_call.1} parent=1 // pred_fallthru
      _
    // Predicated region
    $region10: #{tpu_custom_call.1} parent=1 // pred_check
      _
    $region11: #{tpu_custom_call.1} parent=1 // pred_check_branch
      %35 = sbr.rel (0) target = $region13
    $region12: #{tpu_custom_call.1} parent=1 // pred_region
      %37 = dma.done [#allocation3], 16
    $region13: #{tpu_custom_call.1} parent=1 // pred_fallthru
      _
    // Predicated region
    $region14: #{tpu_custom_call.1} parent=1 // pred_check
      _
    $region15: #{tpu_custom_call.1} parent=1 // pred_check_branch
      %39 = sbr.rel (0) target = $region17
    $region16: #{tpu_custom_call.1} parent=1 // pred_region
      %41 = dma.done [#allocation6], 256
    $region17: #{tpu_custom_call.1} parent=1 // pred_fallthru
      _
    %v42 = vld [vmem:[#allocation2] sm:$0x1]
    %v43 = vld [vmem:[#allocation5] sm:$0xff]
    %v44 = vld [vmem:[#allocation5 + $0x8] sm:$0x1]
    %vm47 = vcmask 1040384
    %v48 = vrot.slane %v43, 7
    %v49 = vrot.slane %v44, 7
    %v50 = vsel %vm47, %v48, %v49
    %v53 = vsel %vm47, %v42, %v48
    %vm55 = vcmask 1041408
    %v56 = vrot.slane %v53, 6
    %v57 = vrot.slane %v50, 6
    %v58 = vsel %vm55, %v56, %v57
    %v61 = vsel %vm55, %v50, %v56
    %vm62 = vcmask 490496
    %63 = vst.msk [vmem:[#allocation7] sm:$0xff] %vm62, %v53
    %64 = vst.msk [vmem:[#allocation7 + $0x8] sm:$0xff] %vm62, %v61
    %vm65 = vcmask 486400
    %66 = vst.msk [vmem:[#allocation7 + $0x10] sm:$0xf] %vm65, %v58
    // Predicated region
    $region18: #{tpu_custom_call.1} parent=1 // pred_check
      _
    $region19: #{tpu_custom_call.1} parent=1 // pred_check_branch
      %68 = sbr.rel (0) target = $region21
    $region20: #{tpu_custom_call.1} parent=1 // pred_region
      %70 = vsyncadd [#allocation4], 0
      %s71 = sshll.u32 [#allocation7], 4
      %s72 = int_to_ptr.vmem [resolvable:$true] %s71
      %s73 = sshll.u32 %s2, 4
      %s74 = int_to_ptr.hbm [resolvable:$true] %s73
      %79 = dma.vmem_to_hbm [thread:$0]  %s72, 384, %s74, [#allocation4], 128, 128, 8
    $region21: #{tpu_custom_call.1} parent=1 // pred_fallthru
      _
    // Predicated region
    $region22: #{tpu_custom_call.1} parent=1 // pred_check
      _
    $region23: #{tpu_custom_call.1} parent=1 // pred_check_branch
      %81 = sbr.rel (0) target = $region25
    $region24: #{tpu_custom_call.1} parent=1 // pred_region
      %83 = dma.done [#allocation4], 384
    $region25: #{tpu_custom_call.1} parent=1 // pred_fallthru
      _
    %84 = vsyncpa [#allocation3], 1
    %85 = vsyncpa [#allocation6], 1
    %86 = vsyncpa [#allocation4], 1

</llo_original>
